<compile_context>
chip_gen: v7x
topology: tpu7x:2x2x1
jax: 0.10.0
libtpu: 0.0.40
codegen_flags: <defaults>
</compile_context>

<pallas_src>
import heapq
import numpy as np

import jax
import jax.numpy as jnp
from jax.experimental import pallas as pl
from jax.experimental.pallas import tpu as pltpu


def _round_up(x, m):
    return ((x + m - 1) // m) * m


def _pick_tile(n, candidates=(512, 256, 128)):
    for c in candidates:
        if n % c == 0:
            return c
    return n


# ----------------------------------------------------------------------------
# Pallas kernel 1: per-vertex squared magnitude  (torch.sum(features*features, 0))
# Tiled over the (padded) vertex/lane axis; batch dim squeezed out of blocks.
# ----------------------------------------------------------------------------
def squared_magnitude(fe_pad):
    """fe_pad: (B, C, V_pad) float32 with V_pad % 128 == 0.  Returns (B, 1, V_pad)."""
    B, C, V_pad = fe_pad.shape
    vt = _pick_tile(V_pad)

    def kernel(fe_ref, out_ref):
        x = fe_ref[...]                                        # (C, vt)
        out_ref[...] = jnp.sum(x * x, axis=0, keepdims=True)   # (1, vt)

    return pl.pallas_call(
        kernel,
        out_shape=jax.ShapeDtypeStruct((B, 1, V_pad), jnp.float32),
        grid=(B, V_pad // vt),
        in_specs=[pl.BlockSpec((None, C, vt), lambda b, v: (b, 0, v))],
        out_specs=pl.BlockSpec((None, 1, vt), lambda b, v: (b, 0, v)),
        compiler_params=pltpu.CompilerParams(
            dimension_semantics=("parallel", "parallel")),
    )(fe_pad)


# ----------------------------------------------------------------------------
# Pallas kernel 2: index-driven passthrough + edge-midpoint mean.
#   out[b, t, :] = 0.5 * (feT[b, a_idx[b,t], :] + feT[b, b_idx[b,t], :])
# For original vertex columns a == b == t  -> exact passthrough copy.
# Indices live in SMEM (scalar prefetch); vertices sit on sublanes so the
# gather is a cheap dynamic sublane-slice; channels are lane-dense (>=128).
# ----------------------------------------------------------------------------
def unpool_features(feT, a_idx, b_idx, out_t_pad, col_tile):
    """feT: (B, V_pad, C_pad) f32; a_idx/b_idx: (B*out_t_pad,) int32.
    Returns (B, out_t_pad, C_pad) float32."""
    B, V_pad, C_pad = feT.shape
    n_col_blocks = out_t_pad // col_tile

    def kernel(a_ref, b_ref, fe_ref, out_ref):
        batch = pl.program_id(0)
        tblk = pl.program_id(1)
        base = batch * out_t_pad + tblk * col_tile

        def body(j, carry):
            ai = a_ref[base + j]
            bi = b_ref[base + j]
            row = (fe_ref[pl.ds(ai, 1), :] + fe_ref[pl.ds(bi, 1), :]) * 0.5
            out_ref[pl.ds(j, 1), :] = row
            return carry

        jax.lax.fori_loop(0, col_tile, body, 0)

    grid_spec = pltpu.PrefetchScalarGridSpec(
        num_scalar_prefetch=2,
        grid=(B, n_col_blocks),
        in_specs=[pl.BlockSpec((None, V_pad, C_pad), lambda b, t, a, bb: (b, 0, 0))],
        out_specs=pl.BlockSpec((None, col_tile, C_pad), lambda b, t, a, bb: (b, t, 0)),
    )
    cost = pl.CostEstimate(
        flops=2 * B * out_t_pad * C_pad,
        transcendentals=0,
        bytes_accessed=int(feT.size * 4 + B * out_t_pad * C_pad * 4
                           + a_idx.size * 4 + b_idx.size * 4),
    )
    return pl.pallas_call(
        kernel,
        out_shape=jax.ShapeDtypeStruct((B, out_t_pad, C_pad), jnp.float32),
        grid_spec=grid_spec,
        compiler_params=pltpu.CompilerParams(
            dimension_semantics=("parallel", "parallel")),
        cost_estimate=cost,
    )(a_idx, b_idx, feT)


# ----------------------------------------------------------------------------
# Minimal mesh container (only the fields that feed the feature computation).
# ----------------------------------------------------------------------------
class SimpleMesh:
    def __init__(self, vs, edges):
        self.vs = np.asarray(vs, dtype=np.float32)
        self.vs_count = self.vs.shape[0]
        self.edges = np.asarray(edges, dtype=np.int64)
        self.edges_count = self.edges.shape[0]
        self.gemm_vs = [set() for _ in range(self.vs_count)]
        for u, v in self.edges:
            self.gemm_vs[int(u)].add(int(v))
            self.gemm_vs[int(v)].add(int(u))


# ----------------------------------------------------------------------------
# Host-side greedy edge-split selection (__build_queue + __unpool_main).
# Returns per-output-column source indices (a, b) into the ORIGINAL vertex
# columns; a == b == t for passthrough columns.
# ----------------------------------------------------------------------------
def _build_unpool_indices(sq, mesh, out_target):
    # __build_queue
    heap = []
    pairs = {}
    for i in range(mesh.vs_count):
        for n in sorted(mesh.gemm_vs[i]):
            if (i, n) not in pairs:
                val = float(sq[i]) + float(sq[n])
                heap.append([-val, i, n])
                pairs[(i, n)] = True
                pairs[(n, i)] = True
    heapq.heapify(heap)

    a_row = np.arange(out_target, dtype=np.int32)   # default: passthrough a == b == t
    b_row = np.arange(out_target, dtype=np.int32)

    edges = mesh.edges.copy()
    edge_mask = np.ones(mesh.edges_count, dtype=bool)
    vs_count = mesh.vs_count
    while vs_count < out_target:
        if not heap:
            raise ValueError("out_target exceeds the number of splittable edges")
        _, vt_id, n_id = heapq.heappop(heap)
        vt_id = int(vt_id)
        n_id = int(n_id)
        # mirrors the reference: argmax returns 0 when no edge matches (stale pair);
        # edge_mask[edge_id] then decides whether anything happens.
        edge_id = int(np.argmax(
            np.logical_or(
                np.logical_and(edges[:, 0] == vt_id, edges[:, 1] == n_id),
                np.logical_and(edges[:, 0] == n_id, edges[:, 1] == vt_id))))
        if edge_mask[edge_id]:
            vt_old = int(edges[edge_id, 0])
            vt_new = int(edges[edge_id, 1])
            new_vt = vs_count
            # fe column new_vt = mean(fe[:, [vt_old, vt_new]], axis=1)
            a_row[new_vt] = vt_old
            b_row[new_vt] = vt_new
            edges = np.append(edges, [[new_vt, vt_new]], axis=0)
            edges[edge_id, 1] = new_vt
            edge_mask[edge_id] = False
            vs_count += 1
            # TODO(synk): faces / gemm_faces / edges_in_face topology bookkeeping from
            # __unpool_edge mutates the mesh objects only and never feeds back into the
            # returned features, so it is not reproduced here.
    return a_row, b_row


# ----------------------------------------------------------------------------
# Forward pass mirroring MeshUnpoolPoint.forward
# ----------------------------------------------------------------------------
def mesh_unpool_point(fe, meshes, out_target):
    """fe: (B, C, V) float array; returns (B, C, out_target) float32."""
    B, C, V = fe.shape
    fe = fe.astype(jnp.float32)
    V_pad = _round_up(V, 128)
    C_pad = _round_up(C, 128)
    T_pad = _round_up(out_target, 128)
    col_tile = 256 if T_pad % 256 == 0 else 128

    # Hot path #1 (Pallas): per-vertex squared magnitude feeding the host heap.
    fe_vpad = jnp.pad(fe, ((0, 0), (0, 0), (0, V_pad - V)))
    sqmag = np.asarray(jax.block_until_ready(squared_magnitude(fe_vpad)))   # (B, 1, V_pad)

    # Host-side greedy heap walk (inherently sequential Python).
    a_idx = np.zeros((B, T_pad), dtype=np.int32)
    b_idx = np.zeros((B, T_pad), dtype=np.int32)
    for m, mesh in enumerate(meshes):
        a_row, b_row = _build_unpool_indices(sqmag[m, 0, :mesh.vs_count], mesh, out_target)
        a_idx[m, :out_target] = a_row
        b_idx[m, :out_target] = b_row

    # Hot path #2 (Pallas): passthrough + midpoint-mean gather in a lane-dense
    # (B, V_pad, C_pad) layout.  Whole per-batch feature block stays VMEM-resident;
    # padded index columns read row 0 and are sliced away below.
    feT = jnp.pad(jnp.transpose(fe_vpad, (0, 2, 1)),
                  ((0, 0), (0, 0), (0, C_pad - C)))
    outT = unpool_features(feT,
                           jnp.asarray(a_idx.reshape(-1)),
                           jnp.asarray(b_idx.reshape(-1)),
                           T_pad, col_tile)
    out = jnp.transpose(outT, (0, 2, 1))[:, :C, :out_target]
    return out


# ----------------------------------------------------------------------------
# Demo
# ----------------------------------------------------------------------------
if __name__ == "__main__":
    B, C, V = 2, 4, 8          # 6 real vertices per mesh, padded columns up to V=8
    OUT_TARGET = 12            # unroll_target -> 6 edge splits per mesh

    # Octahedron: 6 vertices, 12 edges (all pairs except the 3 antipodal ones).
    octa_vs = [[1, 0, 0], [-1, 0, 0], [0, 1, 0], [0, -1, 0], [0, 0, 1], [0, 0, -1]]
    octa_edges = [(0, 2), (0, 3), (0, 4), (0, 5),
                  (1, 2), (1, 3), (1, 4), (1, 5),
                  (2, 4), (2, 5), (3, 4), (3, 5)]
    meshes = [SimpleMesh(octa_vs, octa_edges), SimpleMesh(octa_vs, octa_edges)]

    key = jax.random.PRNGKey(0)
    fe = jax.random.normal(key, (B, C, V), dtype=jnp.float32)

    out = jax.block_until_ready(mesh_unpool_point(fe, meshes, OUT_TARGET))
    assert out.shape == (B, C, OUT_TARGET), out.shape

    # ---------------- correctness cross-checks -------------------------------
    fe_np = np.asarray(fe).astype(np.float64)

    # Kernel 1 vs numpy.
    V_pad = _round_up(V, 128)
    fe_vpad = jnp.pad(fe, ((0, 0), (0, 0), (0, V_pad - V)))
    sq_dev = np.asarray(jax.block_until_ready(squared_magnitude(fe_vpad)))   # (B,1,V_pad)
    sq_ref = np.sum(fe_np * fe_np, axis=1)                                   # (B,V)
    assert np.allclose(sq_dev[:, 0, :V], sq_ref, rtol=1e-5, atol=1e-5)

    # Full forward vs a float64 numpy reference of the same math (same greedy
    # index selection, driven by the same squared magnitudes the kernel used).
    ref = np.zeros((B, C, OUT_TARGET), dtype=np.float64)
    for m, mesh in enumerate(meshes):
        a_row, b_row = _build_unpool_indices(sq_dev[m, 0, :mesh.vs_count], mesh, OUT_TARGET)
        ref[m] = 0.5 * (fe_np[m][:, a_row] + fe_np[m][:, b_row])
    assert np.allclose(np.asarray(out), ref, rtol=1e-5, atol=1e-5)

    print("KERNEL_OK")
</pallas_src>

<mosaic_0001>
module attributes {stable_mosaic.version = 11 : i64} {
  func.func @kernel(%arg0: i32, %arg1: i32, %arg2: memref<1x4x128xf32, #tpu.memory_space<vmem>>, %arg3: memref<1x1x128xf32, #tpu.memory_space<vmem>>) attributes {dimension_semantics = [#tpu.dimension_semantics<parallel>, #tpu.dimension_semantics<parallel>], iteration_bounds = array<i64: 2, 1>, scalar_prefetch = 0 : i64, scratch_operands = 0 : i64, tpu.core_type = #tpu.core_type<tc>, window_params = [{transform_indices = @transform_0, window_bounds = array<i64: 1, 4, 128>}, {transform_indices = @transform_1, window_bounds = array<i64: 1, 1, 128>}]} {
    %c0 = arith.constant 0 : index
    %c0_0 = arith.constant 0 : index
    %c0_1 = arith.constant 0 : index
    %0 = vector.load %arg2[%c0, %c0_0, %c0_1] : memref<1x4x128xf32, #tpu.memory_space<vmem>>, vector<1x4x128xf32>
    %1 = vector.shape_cast %0 : vector<1x4x128xf32> to vector<4x128xf32>
    %2 = arith.mulf %1, %1 : vector<4x128xf32>
    %cst = arith.constant dense<0.000000e+00> : vector<128xf32>
    %3 = vector.multi_reduction <add>, %2, %cst [0] : vector<4x128xf32> to vector<128xf32>
    %4 = vector.shape_cast %3 : vector<128xf32> to vector<1x128xf32>
    %c0_2 = arith.constant 0 : index
    %c0_3 = arith.constant 0 : index
    %c0_4 = arith.constant 0 : index
    %5 = vector.load %arg3[%c0_2, %c0_3, %c0_4] : memref<1x1x128xf32, #tpu.memory_space<vmem>>, vector<1x1x128xf32>
    %6 = vector.shape_cast %5 : vector<1x1x128xf32> to vector<1x128xf32>
    %7 = vector.shape_cast %4 : vector<1x128xf32> to vector<1x1x128xf32>
    tpu.vector_store %arg3[%c0_2, %c0_3, %c0_4], %7 {strides = array<i32>} : memref<1x1x128xf32, #tpu.memory_space<vmem>>, vector<1x1x128xf32>,
    return
  }
  func.func @transform_0(%arg0: i32, %arg1: i32) -> (i32, i32, i32) {
    %c0_i32 = arith.constant 0 : i32
    %c0_i32_0 = arith.constant 0 : i32
    return %arg0, %c0_i32, %arg1 : i32, i32, i32
  }
  func.func @transform_1(%arg0: i32, %arg1: i32) -> (i32, i32, i32) {
    %c0_i32 = arith.constant 0 : i32
    %c0_i32_0 = arith.constant 0 : i32
    return %arg0, %c0_i32, %arg1 : i32, i32, i32
  }
}

</mosaic_0001>

<llo_original>
// kernel: tpu_custom_call.1
$region0: #{tpu_custom_call.1}
  #allocation0 [shape = 'u32[]', space=smem, size = 0x4, offset = 0x4, fixed_abs, tag = 'smem constant byte address 0x4 - core index']
  #allocation1 [shape = 'u32[144,128]{1,0:T(1,128)}', space=vmem, size = 0x12000, scoped, tag = 'internal scratch']
  %s0 = inlined_call_operand.hbm [shape: f32[2,4,128], index: 0, kind: input, shape index: {}]
  %s1 = inlined_call_operand.hbm [shape: f32[2,1,128], index: 1, kind: output, shape index: {}]
  %s2 = sld [smem:[#allocation0]]
  $region41: #{tpu_custom_call.1} parent=0
    _
  %s4 = ssub.s32 1, %s2
  %s5 = scalar_select 0, %s4, %s2
  $region1: #{tpu_custom_call.1} parent=0
    #allocation2 [shape = 'u8[4096]{0}', space=vmem, size = 0x1000, scoped, tag = 'input window, operand 0']
    #allocation3 [shape = 's32[2]{0}', space=sflag, size = 0x8, scoped, tag = 'scoped memory for tpu_custom_call.1']
    #allocation4 [shape = 's32[2]{0}', space=sflag, size = 0x8, scoped, tag = 'scoped memory for tpu_custom_call.1']
    #allocation5 [shape = 'u8[1024]{0}', space=vmem, size = 0x400, scoped, tag = 'output window, operand 0']
    %6 = vsyncpa [#allocation3], 0
    %s7 = scalar_lea.sflag [#allocation3], 1
    %8 = vsyncpa %s7, 0
    %9 = vsyncpa [#allocation4], 0
    %s10 = scalar_lea.sflag [#allocation4], 1
    %11 = vsyncpa %s10, 0
    loop: start=0, step=1, limit=4
    $region2: #{tpu_custom_call.1} parent=1 // loop_pre_header
      _
    $region3: #{tpu_custom_call.1} parent=1 // loop_header
      %s13 = sphi 0, %s17
      %p14 = scmp.ge.s32.totalorder %s13, 4
      %s20 = sphi 0, %s32
      %s21 = sphi 0, %s28
      %s22 = sphi 0, %s20
      %s23 = sphi 0, %s21
      %s24 = sphi 0, %s22
      %s25 = sphi 0, %s23
      %s37 = sphi 0, %s39
      %s40 = sphi 0, %s37
      %s41 = sphi 0, %s40
      %s57 = sphi 0, %s41
      %s65 = sphi 0, %s67
      %s68 = sphi 0, %s65
      %s69 = sphi 0, %s68
      %s85 = sphi 0, %s69
    $region4: #{tpu_custom_call.1} parent=1 // loop_header_branch
      %16 = sbr.rel (%p14) target = $region8
    $region5: #{tpu_custom_call.1} parent=1 // loop_body
      %s18 = ssub.s32 %s13, 1
      %s19 = ssub.s32 %s13, 2
      %s26 = sadd.s32 1, %s21
      %p27 = scmp.ge.s32.totalorder %s26, 1
      %s28 = scalar_select %p27, 0, %s26
      %s29 = sadd.s32 1, %s20
      %s30 = scalar_select %p27, %s29, %s20
      %p31 = scmp.ge.s32.totalorder %s30, 2
      %s32 = scalar_select %p31, 0, %s30
      %s33 = ssub.s32 %s20, %s32
      %s34 = ssub.s32 %s21, %s28
      %s35 = sor.u32 %s33, %s34
      %p36 = scmp.eq.s32.totalorder %s35, 0
      %s38 = sadd.s32 %s37, 1
      %s39 = scalar_select %p36, %s37, %s38
      %p42 = pneg %p36
      %p43 = scmp.eq.s32.totalorder %s13, 1
      %p44 = por %p42, %p43
      %p45 = scmp.ne.s32.totalorder %s37, %s40
      %p46 = scmp.eq.s32.totalorder %s13, 0
      %p47 = por %p45, %p46
      %p48 = scmp.ne.s32.totalorder %s37, %s40
      %p49 = scmp.eq.s32.totalorder %s18, 1
      %p50 = por %p48, %p49
      %p51 = scmp.ne.s32.totalorder %s40, %s41
      %p52 = scmp.eq.s32.totalorder %s18, 0
      %p53 = por %p51, %p52
      %p54 = scmp.ne.s32.totalorder %s40, %s41
      %p55 = scmp.eq.s32.totalorder %s19, 1
      %p56 = por %p54, %p55
      %p58 = scmp.ne.s32.totalorder %s41, %s57
      %p59 = scmp.eq.s32.totalorder %s19, 0
      %p60 = por %p58, %p59
      %s61 = ssub.s32 %s20, %s32
      %s62 = ssub.s32 %s21, %s28
      %s63 = sor.u32 %s61, %s62
      %p64 = scmp.eq.s32.totalorder %s63, 0
      %s66 = sadd.s32 %s65, 1
      %s67 = scalar_select %p64, %s65, %s66
      %p70 = pneg %p64
      %p71 = scmp.eq.s32.totalorder %s13, 1
      %p72 = por %p70, %p71
      %p73 = scmp.ne.s32.totalorder %s65, %s68
      %p74 = scmp.eq.s32.totalorder %s13, 0
      %p75 = por %p73, %p74
      %p76 = scmp.ne.s32.totalorder %s65, %s68
      %p77 = scmp.eq.s32.totalorder %s18, 1
      %p78 = por %p76, %p77
      %p79 = scmp.ne.s32.totalorder %s68, %s69
      %p80 = scmp.eq.s32.totalorder %s18, 0
      %p81 = por %p79, %p80
      %p82 = scmp.ne.s32.totalorder %s68, %s69
      %p83 = scmp.eq.s32.totalorder %s19, 1
      %p84 = por %p82, %p83
      %p86 = scmp.ne.s32.totalorder %s69, %s85
      %p87 = scmp.eq.s32.totalorder %s19, 0
      %p88 = por %p86, %p87
      %p89 = scmp.le.s32.totalorder 1, %s13
      %p90 = scmp.lt.s32.totalorder %s13, 3
      %p91 = pnand %p89, %p90
      %p92 = pneg %p91
      // Predicated region
      $region9: #{tpu_custom_call.1} parent=5 // pred_check
        _
      $region10: #{tpu_custom_call.1} parent=5 // pred_check_branch
        %94 = sbr.rel (%p91) target = $region12
      $region11: #{tpu_custom_call.1} parent=5 // pred_region
        %s95 = ssub.s32 %s13, 1
      $region12: #{tpu_custom_call.1} parent=5 // pred_fallthru
        _
      %p96 = scmp.lt.s32.totalorder %s13, 2
      // Predicated region
      $region13: #{tpu_custom_call.1} parent=5 // pred_check
        %p97 = pneg %p96
      $region14: #{tpu_custom_call.1} parent=5 // pred_check_branch
        %99 = sbr.rel (%p97) target = $region16
      $region15: #{tpu_custom_call.1} parent=5 // pred_region
        // Predicated region
        $region17: #{tpu_custom_call.1} parent=15 // pred_check
          %p100 = pneg %p47
        $region18: #{tpu_custom_call.1} parent=15 // pred_check_branch
          %102 = sbr.rel (%p100) target = $region20
        $region19: #{tpu_custom_call.1} parent=15 // pred_region
          %s103 = sand.u32 %s37, 1
          %s104 = scalar_lea.sflag [#allocation3], %s103
          %s105 = sand.u32 %s37, 1
          %s106 = smul.addr %s105, 4
          %s107 = scalar_lea.vmem [#allocation2], %s106
          %s109 = ssub.s32 64, 64
          %110 = vsyncadd %s104, %s109
          %s111 = sadd.s32 %s21, %s20
          %s112 = smul.addr %s111, 64
          %s113 = scalar_lea.hbm %s0, %s112
          %s115 = sshll.u32 %s107, 4
          %s116 = int_to_ptr.vmem [resolvable:$true] %s115
          %118 = dma.hbm_to_vmem [thread:$0]  %s113, 64, %s116, %s104
        $region20: #{tpu_custom_call.1} parent=15 // pred_fallthru
          _
      $region16: #{tpu_custom_call.1} parent=5 // pred_fallthru
        _
      %p119 = scmp.le.s32.totalorder 1, %s13
      %p120 = scmp.lt.s32.totalorder %s13, 3
      %p121 = pnand %p119, %p120
      %p122 = pneg %p121
      // Predicated region
      $region21: #{tpu_custom_call.1} parent=5 // pred_check
        _
      $region22: #{tpu_custom_call.1} parent=5 // pred_check_branch
        %124 = sbr.rel (%p121) target = $region24
      $region23: #{tpu_custom_call.1} parent=5 // pred_region
        %s125 = ssub.s32 %s13, 1
        %s126 = sand.u32 %s40, 1
        %s127 = scalar_lea.sflag [#allocation3], %s126
        %s128 = sand.u32 %s40, 1
        %s129 = smul.addr %s128, 4
        %s130 = scalar_lea.vmem [#allocation2], %s129
        // Predicated region
        $region25: #{tpu_custom_call.1} parent=23 // pred_check
          %p131 = pneg %p53
        $region26: #{tpu_custom_call.1} parent=23 // pred_check_branch
          %133 = sbr.rel (%p131) target = $region28
        $region27: #{tpu_custom_call.1} parent=23 // pred_region
          %134 = dma.done %s127, 64
        $region28: #{tpu_custom_call.1} parent=23 // pred_fallthru
          _
        %s135 = sand.u32 %s40, 1
        %s136 = scalar_lea.sflag [#allocation3], %s135
        %s137 = sand.u32 %s40, 1
        %s138 = smul.addr %s137, 4
        %s139 = scalar_lea.vmem [#allocation2], %s138
        %p140 = pneg %p53
        %p141 = pneg %p50
        %p142 = pneg %p81
        %p143 = pneg %p78
        %s144 = sand.u32 %s68, 1
        %s145 = scalar_lea.sflag [#allocation4], %s144
        %s146 = sand.u32 %s68, 1
        %s147 = scalar_lea.vmem [#allocation5], %s146
        %v148 = vld [vmem:[%s130] sm:$0xf]
        %v149 = vmul.f32 %v148, %v148
        %vm150 = vcmask 1043456
        %v151 = vsel %vm150, %v149, 0.0
        %v152 = vrot.slane %v151, 4
        %v153 = vadd.f32 %v151, %v152
        %v154 = vrot.slane %v153, 2
        %v155 = vadd.f32 %v153, %v154
        %v156 = vrot.slane %v155, 1
        %v157 = vadd.f32 %v155, %v156
        %158 = vst [vmem:[%s147] sm:$0x1] %v157
        %s159 = sand.u32 %s68, 1
        %s160 = scalar_lea.sflag [#allocation4], %s159
        %s161 = sand.u32 %s68, 1
        %s162 = scalar_lea.vmem [#allocation5], %s161
        // Predicated region
        $region29: #{tpu_custom_call.1} parent=23 // pred_check
          %p163 = pneg %p78
        $region30: #{tpu_custom_call.1} parent=23 // pred_check_branch
          %165 = sbr.rel (%p163) target = $region32
        $region31: #{tpu_custom_call.1} parent=23 // pred_region
          %s167 = ssub.s32 16, 16
          %168 = vsyncadd %s160, %s167
          %s169 = sadd.s32 %s23, %s22
          %s170 = smul.addr %s169, 16
          %s171 = scalar_lea.hbm %s1, %s170
          %s173 = sshll.u32 %s162, 4
          %s174 = int_to_ptr.vmem [resolvable:$true] %s173
          %176 = dma.vmem_to_hbm [thread:$0]  %s174, 16, %s171, %s160
        $region32: #{tpu_custom_call.1} parent=23 // pred_fallthru
          _
      $region24: #{tpu_custom_call.1} parent=5 // pred_fallthru
        _
      %p177 = scmp.le.s32.totalorder 2, %s13
      // Predicated region
      $region33: #{tpu_custom_call.1} parent=5 // pred_check
        %p178 = pneg %p177
      $region34: #{tpu_custom_call.1} parent=5 // pred_check_branch
        %180 = sbr.rel (%p178) target = $region36
      $region35: #{tpu_custom_call.1} parent=5 // pred_region
        %s181 = ssub.s32 %s13, 2
        // Predicated region
        $region37: #{tpu_custom_call.1} parent=35 // pred_check
          %p182 = pneg %p84
        $region38: #{tpu_custom_call.1} parent=35 // pred_check_branch
          %184 = sbr.rel (%p182) target = $region40
        $region39: #{tpu_custom_call.1} parent=35 // pred_region
          %s185 = sand.u32 %s69, 1
          %s186 = scalar_lea.sflag [#allocation4], %s185
          %s187 = sand.u32 %s69, 1
          %s188 = scalar_lea.vmem [#allocation5], %s187
          %189 = dma.done %s186, 16
        $region40: #{tpu_custom_call.1} parent=35 // pred_fallthru
          _
      $region36: #{tpu_custom_call.1} parent=5 // pred_fallthru
        _
    $region6: #{tpu_custom_call.1} parent=1 // loop_footer
      %s17 = sadd.s32 1, %s13
    $region7: #{tpu_custom_call.1} parent=1 // loop_footer_branch
      %12 = sbr.rel target = $region3
    $region8: #{tpu_custom_call.1} parent=1 // loop_exit
      _
    %190 = vsyncpa [#allocation3], 1
    %s191 = scalar_lea.sflag [#allocation3], 1
    %192 = vsyncpa %s191, 1
    %193 = vsyncpa [#allocation4], 1
    %s194 = scalar_lea.sflag [#allocation4], 1
    %195 = vsyncpa %s194, 1

</llo_original>
